<compile_context>
chip_gen: v7x
topology: tpu7x:2x2x1
jax: 0.10.0
libtpu: 0.0.40
codegen_flags: <defaults>
</compile_context>

<pallas_src>
import functools

import jax
import jax.numpy as jnp
from jax.experimental import pallas as pl
from jax.experimental.pallas import tpu as pltpu

HIDDEN_STATE = 256


def _round_up(x, m):
    return (x + m - 1) // m * m


def _actor_kernel(s_ref, w1_ref, b1_ref, w2_ref, b2_ref, w3_ref, b3_ref,
                  o_ref, *, max_action):
    # Transposed layout: activations are (features, batch_tile); batch on lanes.
    s = s_ref[...].astype(jnp.bfloat16)                      # (tb, state_dim)

    # layer 1: h = W1 . s^T  -> (H, tb); contract the shared state_dim axis.
    h = jnp.einsum("hs,bs->hb", w1_ref[...], s,
                   preferred_element_type=jnp.float32)
    h = jnp.maximum(h + b1_ref[...], 0.0)                    # bias (H,1) bcast

    # layer 2: (H, H) @ (H, tb) -> (H, tb); maps exactly onto the MXU tile.
    h = jnp.dot(w2_ref[...], h.astype(jnp.bfloat16),
                preferred_element_type=jnp.float32)
    h = jnp.maximum(h + b2_ref[...], 0.0)

    # layer 3: (a_pad, H) @ (H, tb) -> (a_pad, tb); tanh only over a_pad rows
    # (no 128-wide lane padding), scaled by max_action.
    a = jnp.dot(w3_ref[...], h.astype(jnp.bfloat16),
                preferred_element_type=jnp.float32)
    a = jnp.tanh(a + b3_ref[...])
    o_ref[...] = (max_action * a).astype(o_ref.dtype)


def actor_forward(state, params, max_action, *, tb_cap=2048):
    """state: (B, state_dim) f32.  params: bf16 (out,in) weights + f32 (out,1) biases."""
    w1, b1, w2, b2, w3, b3 = (params["w1"], params["b1"], params["w2"],
                              params["b2"], params["w3"], params["b3"])
    B, state_dim = state.shape
    H = w1.shape[0]
    action_dim = w3.shape[0]

    # Output feature dim only needs sublane padding (multiple of 8), not 128.
    # Extra rows have zero weights/biases -> tanh(0) = 0, sliced off below.
    a_pad = _round_up(action_dim, 8)
    if a_pad != action_dim:
        w3 = jnp.pad(w3, ((0, a_pad - action_dim), (0, 0)))
        b3 = jnp.pad(b3, ((0, a_pad - action_dim), (0, 0)))

    # Batch tiling: >= 2 grid steps (even count) so both v7x TensorCores get
    # work; tile size chosen to minimize batch padding; lanes need tb % 128 == 0.
    n = max(2, pl.cdiv(B, tb_cap))
    if n % 2:
        n += 1
    tb = _round_up(pl.cdiv(B, n), 128)
    b_pad = n * tb
    if b_pad != B:
        state = jnp.pad(state, ((0, b_pad - B), (0, 0)))

    kernel = functools.partial(_actor_kernel, max_action=float(max_action))

    weights_bytes = sum(int(a.size) * a.dtype.itemsize
                        for a in (w1, b1, w2, b2, w3, b3))
    cost = pl.CostEstimate(
        flops=2 * b_pad * (state_dim * H + H * H + H * a_pad),
        transcendentals=b_pad * a_pad,
        bytes_accessed=int(state.size) * state.dtype.itemsize
        + weights_bytes + a_pad * b_pad * 4,
    )

    out_t = pl.pallas_call(
        kernel,
        out_shape=jax.ShapeDtypeStruct((a_pad, b_pad), state.dtype),
        grid=(n,),
        in_specs=[
            pl.BlockSpec((tb, state_dim), lambda i: (i, 0)),   # batch-tiled state
            pl.BlockSpec(w1.shape, lambda i: (0, 0)),          # weights/biases stay
            pl.BlockSpec(b1.shape, lambda i: (0, 0)),          # VMEM-resident
            pl.BlockSpec(w2.shape, lambda i: (0, 0)),
            pl.BlockSpec(b2.shape, lambda i: (0, 0)),
            pl.BlockSpec(w3.shape, lambda i: (0, 0)),
            pl.BlockSpec(b3.shape, lambda i: (0, 0)),
        ],
        out_specs=pl.BlockSpec((a_pad, tb), lambda i: (0, i)),  # lane-dense output
        compiler_params=pltpu.CompilerParams(
            dimension_semantics=("parallel",)),
        cost_estimate=cost,
    )(state, w1, b1, w2, b2, w3, b3)

    # Transposed output is (a_pad, b_pad): the cleanup slice/transpose touches
    # ~action_dim*B floats (16x less HBM than the old 128-lane-padded layout).
    return out_t[:action_dim, :B].T


def init_actor_params(key, state_dim, action_dim):
    """PyTorch nn.Linear init U(-1/sqrt(in), 1/sqrt(in)); (out,in) weights in bf16."""
    ks = jax.random.split(key, 6)

    def linear(kw, kb, fan_in, fan_out):
        bound = 1.0 / jnp.sqrt(jnp.float32(fan_in))
        w = jax.random.uniform(kw, (fan_out, fan_in), jnp.float32, -bound, bound)
        b = jax.random.uniform(kb, (fan_out, 1), jnp.float32, -bound, bound)
        return w.astype(jnp.bfloat16), b          # bf16 weights, f32 biases

    w1, b1 = linear(ks[0], ks[1], state_dim, HIDDEN_STATE)
    w2, b2 = linear(ks[2], ks[3], HIDDEN_STATE, HIDDEN_STATE)
    w3, b3 = linear(ks[4], ks[5], HIDDEN_STATE, action_dim)
    return {"w1": w1, "b1": b1, "w2": w2, "b2": b2, "w3": w3, "b3": b3}


def actor_reference(state, params, max_action):
    """Pure-JAX reference (natural layout) with the same bf16 operand casts."""
    def bf(x):
        return x.astype(jnp.bfloat16).astype(jnp.float32)

    w1 = params["w1"].astype(jnp.float32)
    w2 = params["w2"].astype(jnp.float32)
    w3 = params["w3"].astype(jnp.float32)
    a = jnp.maximum(bf(state) @ w1.T + params["b1"].T, 0.0)
    a = jnp.maximum(bf(a) @ w2.T + params["b2"].T, 0.0)
    return max_action * jnp.tanh(bf(a) @ w3.T + params["b3"].T)


if __name__ == "__main__":
    key = jax.random.PRNGKey(0)
    k_param, k_state = jax.random.split(key)

    batch = 4
    state_dim = 16
    action_dim = 8
    max_action = 1.0

    params = init_actor_params(k_param, state_dim, action_dim)
    state = jax.random.normal(k_state, (batch, state_dim), jnp.float32)

    out = actor_forward(state, params, max_action)
    out = jax.block_until_ready(out)

    ref = actor_reference(state, params, max_action)
    assert out.shape == (batch, action_dim)
    max_err = float(jnp.max(jnp.abs(out - ref)))
    assert jnp.allclose(out, ref, atol=1e-3, rtol=1e-3), f"mismatch vs reference (max err {max_err})"

    print("KERNEL_OK")
</pallas_src>

<mosaic_0001>
module attributes {stable_mosaic.version = 11 : i64} {
  func.func @_actor_kernel(%arg0: i32, %arg1: memref<128x16xf32, #tpu.memory_space<vmem>>, %arg2: memref<256x16xbf16, #tpu.memory_space<vmem>>, %arg3: memref<256x1xf32, #tpu.memory_space<vmem>>, %arg4: memref<256x256xbf16, #tpu.memory_space<vmem>>, %arg5: memref<256x1xf32, #tpu.memory_space<vmem>>, %arg6: memref<8x256xbf16, #tpu.memory_space<vmem>>, %arg7: memref<8x1xf32, #tpu.memory_space<vmem>>, %arg8: memref<8x128xf32, #tpu.memory_space<vmem>>) attributes {dimension_semantics = [#tpu.dimension_semantics<parallel>], iteration_bounds = array<i64: 2>, scalar_prefetch = 0 : i64, scratch_operands = 0 : i64, tpu.core_type = #tpu.core_type<tc>, window_params = [{transform_indices = @transform_0, window_bounds = array<i64: 128, 16>}, {pipeline_mode = #tpu.pipeline_mode<synchronous>, transform_indices = @transform_1, window_bounds = array<i64: 256, 16>}, {pipeline_mode = #tpu.pipeline_mode<synchronous>, transform_indices = @transform_2, window_bounds = array<i64: 256, 1>}, {pipeline_mode = #tpu.pipeline_mode<synchronous>, transform_indices = @transform_3, window_bounds = array<i64: 256, 256>}, {pipeline_mode = #tpu.pipeline_mode<synchronous>, transform_indices = @transform_4, window_bounds = array<i64: 256, 1>}, {pipeline_mode = #tpu.pipeline_mode<synchronous>, transform_indices = @transform_5, window_bounds = array<i64: 8, 256>}, {pipeline_mode = #tpu.pipeline_mode<synchronous>, transform_indices = @transform_6, window_bounds = array<i64: 8, 1>}, {transform_indices = @transform_7, window_bounds = array<i64: 8, 128>}]} {
    %c0 = arith.constant 0 : index
    %c0_0 = arith.constant 0 : index
    %0 = vector.load %arg1[%c0, %c0_0] : memref<128x16xf32, #tpu.memory_space<vmem>>, vector<128x16xf32>
    %1 = arith.truncf %0 : vector<128x16xf32> to vector<128x16xbf16>
    %c0_1 = arith.constant 0 : index
    %c0_2 = arith.constant 0 : index
    %2 = vector.load %arg2[%c0_1, %c0_2] : memref<256x16xbf16, #tpu.memory_space<vmem>>, vector<256x16xbf16>
    "tpu.trace_start"() <{level = 10 : i32, message = "hs,bs->hb"}> : () -> ()
    %cst = arith.constant dense<0.000000e+00> : vector<256x128xf32>
    %3 = tpu.matmul %2, %1, %cst {dimension_numbers = #tpu.dot_dimension_numbers<[1], [1], [0], [0], [0, 0, 1, 0], [], []>} : vector<256x16xbf16>, vector<128x16xbf16>, vector<256x128xf32> -> vector<256x128xf32>
    "tpu.trace_stop"() : () -> ()
    %c0_3 = arith.constant 0 : index
    %c0_4 = arith.constant 0 : index
    %4 = vector.load %arg3[%c0_3, %c0_4] : memref<256x1xf32, #tpu.memory_space<vmem>>, vector<256x1xf32>
    %5 = vector.broadcast %4 : vector<256x1xf32> to vector<256x128xf32>
    %6 = arith.addf %3, %5 : vector<256x128xf32>
    %cst_5 = arith.constant 0.000000e+00 : f32
    %7 = vector.broadcast %cst_5 : f32 to vector<256x128xf32>
    %8 = arith.maximumf %6, %7 : vector<256x128xf32>
    %c0_6 = arith.constant 0 : index
    %c0_7 = arith.constant 0 : index
    %9 = vector.load %arg4[%c0_6, %c0_7] : memref<256x256xbf16, #tpu.memory_space<vmem>>, vector<256x256xbf16>
    %10 = arith.truncf %8 : vector<256x128xf32> to vector<256x128xbf16>
    %cst_8 = arith.constant dense<0.000000e+00> : vector<256x128xf32>
    %11 = tpu.matmul %9, %10, %cst_8 {dimension_numbers = #tpu.dot_dimension_numbers<[1], [0], [0], [1], [0, 0, 1, 1], [], []>} : vector<256x256xbf16>, vector<256x128xbf16>, vector<256x128xf32> -> vector<256x128xf32>
    %c0_9 = arith.constant 0 : index
    %c0_10 = arith.constant 0 : index
    %12 = vector.load %arg5[%c0_9, %c0_10] : memref<256x1xf32, #tpu.memory_space<vmem>>, vector<256x1xf32>
    %13 = vector.broadcast %12 : vector<256x1xf32> to vector<256x128xf32>
    %14 = arith.addf %11, %13 : vector<256x128xf32>
    %cst_11 = arith.constant 0.000000e+00 : f32
    %15 = vector.broadcast %cst_11 : f32 to vector<256x128xf32>
    %16 = arith.maximumf %14, %15 : vector<256x128xf32>
    %c0_12 = arith.constant 0 : index
    %c0_13 = arith.constant 0 : index
    %17 = vector.load %arg6[%c0_12, %c0_13] : memref<8x256xbf16, #tpu.memory_space<vmem>>, vector<8x256xbf16>
    %18 = arith.truncf %16 : vector<256x128xf32> to vector<256x128xbf16>
    %cst_14 = arith.constant dense<0.000000e+00> : vector<8x128xf32>
    %19 = tpu.matmul %17, %18, %cst_14 {dimension_numbers = #tpu.dot_dimension_numbers<[1], [0], [0], [1], [0, 0, 1, 1], [], []>} : vector<8x256xbf16>, vector<256x128xbf16>, vector<8x128xf32> -> vector<8x128xf32>
    %c0_15 = arith.constant 0 : index
    %c0_16 = arith.constant 0 : index
    %20 = vector.load %arg7[%c0_15, %c0_16] : memref<8x1xf32, #tpu.memory_space<vmem>>, vector<8x1xf32>
    %21 = vector.broadcast %20 : vector<8x1xf32> to vector<8x128xf32>
    %22 = arith.addf %19, %21 : vector<8x128xf32>
    %23 = math.tanh %22 : vector<8x128xf32>
    %cst_17 = arith.constant 1.000000e+00 : f32
    %24 = vector.broadcast %cst_17 : f32 to vector<8x128xf32>
    %25 = arith.mulf %24, %23 : vector<8x128xf32>
    %c0_18 = arith.constant 0 : index
    %c0_19 = arith.constant 0 : index
    %26 = vector.load %arg8[%c0_18, %c0_19] : memref<8x128xf32, #tpu.memory_space<vmem>>, vector<8x128xf32>
    tpu.vector_store %arg8[%c0_18, %c0_19], %25 {strides = array<i32>} : memref<8x128xf32, #tpu.memory_space<vmem>>, vector<8x128xf32>,
    return
  }
  func.func @transform_0(%arg0: i32) -> (i32, i32) {
    %c0_i32 = arith.constant 0 : i32
    %c0_i32_0 = arith.constant 0 : i32
    return %arg0, %c0_i32 : i32, i32
  }
  func.func @transform_1(%arg0: i32) -> (i32, i32) {
    %c0_i32 = arith.constant 0 : i32
    %c0_i32_0 = arith.constant 0 : i32
    %c0_i32_1 = arith.constant 0 : i32
    return %c0_i32, %c0_i32_0 : i32, i32
  }
  func.func @transform_2(%arg0: i32) -> (i32, i32) {
    %c0_i32 = arith.constant 0 : i32
    %c0_i32_0 = arith.constant 0 : i32
    %c0_i32_1 = arith.constant 0 : i32
    return %c0_i32, %c0_i32_0 : i32, i32
  }
  func.func @transform_3(%arg0: i32) -> (i32, i32) {
    %c0_i32 = arith.constant 0 : i32
    %c0_i32_0 = arith.constant 0 : i32
    %c0_i32_1 = arith.constant 0 : i32
    return %c0_i32, %c0_i32_0 : i32, i32
  }
  func.func @transform_4(%arg0: i32) -> (i32, i32) {
    %c0_i32 = arith.constant 0 : i32
    %c0_i32_0 = arith.constant 0 : i32
    %c0_i32_1 = arith.constant 0 : i32
    return %c0_i32, %c0_i32_0 : i32, i32
  }
  func.func @transform_5(%arg0: i32) -> (i32, i32) {
    %c0_i32 = arith.constant 0 : i32
    %c0_i32_0 = arith.constant 0 : i32
    %c0_i32_1 = arith.constant 0 : i32
    return %c0_i32, %c0_i32_0 : i32, i32
  }
  func.func @transform_6(%arg0: i32) -> (i32, i32) {
    %c0_i32 = arith.constant 0 : i32
    %c0_i32_0 = arith.constant 0 : i32
    %c0_i32_1 = arith.constant 0 : i32
    return %c0_i32, %c0_i32_0 : i32, i32
  }
  func.func @transform_7(%arg0: i32) -> (i32, i32) {
    %c0_i32 = arith.constant 0 : i32
    %c0_i32_0 = arith.constant 0 : i32
    return %c0_i32, %arg0 : i32, i32
  }
}

</mosaic_0001>

<llo_original>
// kernel: tpu_custom_call.1
$region0: #{tpu_custom_call.1}
  #allocation0 [shape = 'u32[]', space=smem, size = 0x4, offset = 0x4, fixed_abs, tag = 'smem constant byte address 0x4 - core index']
  #allocation1 [shape = 'u32[144,128]{1,0:T(1,128)}', space=vmem, size = 0x12000, scoped, tag = 'internal scratch']
  %s0 = inlined_call_operand.vmem [shape: f32[256,16], index: 0, kind: input, shape index: {}]
  %s1 = inlined_call_operand.vmem [shape: bf16[256,16], index: 1, kind: input, shape index: {}]
  %s2 = inlined_call_operand.vmem [shape: f32[256,1], index: 2, kind: input, shape index: {}]
  %s3 = inlined_call_operand.vmem [shape: bf16[256,256], index: 3, kind: input, shape index: {}]
  %s4 = inlined_call_operand.vmem [shape: f32[256,1], index: 4, kind: input, shape index: {}]
  %s5 = inlined_call_operand.vmem [shape: bf16[8,256], index: 5, kind: input, shape index: {}]
  %s6 = inlined_call_operand.vmem [shape: f32[8,1], index: 6, kind: input, shape index: {}]
  %s7 = inlined_call_operand.hbm [shape: f32[8,256], index: 7, kind: output, shape index: {}]
  %s8 = sld [smem:[#allocation0]]
  $region61: #{tpu_custom_call.1} parent=0
    _
  %s10 = ssub.s32 1, %s8
  %s11 = scalar_select 0, %s10, %s8
  $region1: #{tpu_custom_call.1} parent=0
    #allocation2 [shape = 'u8[8192]{0}', space=vmem, size = 0x2000, scoped, tag = 'output window, operand 0']
    #allocation3 [shape = 's32[2]{0}', space=sflag, size = 0x8, scoped, tag = 'scoped memory for tpu_custom_call.1']
    %12 = vsyncpa [#allocation3], 0
    %s13 = scalar_lea.sflag [#allocation3], 1
    %14 = vsyncpa %s13, 0
    loop: start=0, step=1, limit=4
    $region2: #{tpu_custom_call.1} parent=1 // loop_pre_header
      _
    $region3: #{tpu_custom_call.1} parent=1 // loop_header
      %s16 = sphi 0, %s20
      %p17 = scmp.ge.s32.totalorder %s16, 4
      %s26 = sphi 0, %s28
      %s29 = sphi 0, %s26
      %s30 = sphi 0, %s29
      %s46 = sphi 0, %s30
      %s50 = sphi 0, %s50
      %s52 = sphi 0, %s50
      %s53 = sphi 0, %s52
      %s67 = sphi 0, %s53
      %s71 = sphi 0, %s71
      %s73 = sphi 0, %s71
      %s74 = sphi 0, %s73
      %s88 = sphi 0, %s74
      %s92 = sphi 0, %s92
      %s94 = sphi 0, %s92
      %s95 = sphi 0, %s94
      %s109 = sphi 0, %s95
      %s113 = sphi 0, %s113
      %s115 = sphi 0, %s113
      %s116 = sphi 0, %s115
      %s130 = sphi 0, %s116
      %s134 = sphi 0, %s134
      %s136 = sphi 0, %s134
      %s137 = sphi 0, %s136
      %s151 = sphi 0, %s137
      %s155 = sphi 0, %s155
      %s157 = sphi 0, %s155
      %s158 = sphi 0, %s157
      %s172 = sphi 0, %s158
      %s178 = sphi 0, %s180
      %s181 = sphi 0, %s178
      %s182 = sphi 0, %s181
      %s198 = sphi 0, %s182
    $region4: #{tpu_custom_call.1} parent=1 // loop_header_branch
      %19 = sbr.rel (%p17) target = $region8
    $region5: #{tpu_custom_call.1} parent=1 // loop_body
      %s21 = ssub.s32 %s16, 1
      %s22 = ssub.s32 %s16, 2
      %s23 = sadd.s32 %s16, 1
      %s24 = ssub.s32 %s16, %s23
      %p25 = scmp.eq.s32.totalorder %s24, 0
      %s27 = sadd.s32 %s26, 1
      %s28 = scalar_select %p25, %s26, %s27
      %p31 = pneg %p25
      %p32 = scmp.eq.s32.totalorder %s16, 1
      %p33 = por %p31, %p32
      %p34 = scmp.ne.s32.totalorder %s26, %s29
      %p35 = scmp.eq.s32.totalorder %s16, 0
      %p36 = por %p34, %p35
      %p37 = scmp.ne.s32.totalorder %s26, %s29
      %p38 = scmp.eq.s32.totalorder %s21, 1
      %p39 = por %p37, %p38
      %p40 = scmp.ne.s32.totalorder %s29, %s30
      %p41 = scmp.eq.s32.totalorder %s21, 0
      %p42 = por %p40, %p41
      %p43 = scmp.ne.s32.totalorder %s29, %s30
      %p44 = scmp.eq.s32.totalorder %s22, 1
      %p45 = por %p43, %p44
      %p47 = scmp.ne.s32.totalorder %s30, %s46
      %p48 = scmp.eq.s32.totalorder %s22, 0
      %p49 = por %p47, %p48
      %s51 = sadd.s32 %s50, 1
      %p54 = scmp.eq.s32.totalorder %s16, 1
      %p55 = scmp.ne.s32.totalorder %s50, %s52
      %p56 = scmp.eq.s32.totalorder %s16, 0
      %p57 = por %p55, %p56
      %p58 = scmp.ne.s32.totalorder %s50, %s52
      %p59 = scmp.eq.s32.totalorder %s21, 1
      %p60 = por %p58, %p59
      %p61 = scmp.ne.s32.totalorder %s52, %s53
      %p62 = scmp.eq.s32.totalorder %s21, 0
      %p63 = por %p61, %p62
      %p64 = scmp.ne.s32.totalorder %s52, %s53
      %p65 = scmp.eq.s32.totalorder %s22, 1
      %p66 = por %p64, %p65
      %p68 = scmp.ne.s32.totalorder %s53, %s67
      %p69 = scmp.eq.s32.totalorder %s22, 0
      %p70 = por %p68, %p69
      %s72 = sadd.s32 %s71, 1
      %p75 = scmp.eq.s32.totalorder %s16, 1
      %p76 = scmp.ne.s32.totalorder %s71, %s73
      %p77 = scmp.eq.s32.totalorder %s16, 0
      %p78 = por %p76, %p77
      %p79 = scmp.ne.s32.totalorder %s71, %s73
      %p80 = scmp.eq.s32.totalorder %s21, 1
      %p81 = por %p79, %p80
      %p82 = scmp.ne.s32.totalorder %s73, %s74
      %p83 = scmp.eq.s32.totalorder %s21, 0
      %p84 = por %p82, %p83
      %p85 = scmp.ne.s32.totalorder %s73, %s74
      %p86 = scmp.eq.s32.totalorder %s22, 1
      %p87 = por %p85, %p86
      %p89 = scmp.ne.s32.totalorder %s74, %s88
      %p90 = scmp.eq.s32.totalorder %s22, 0
      %p91 = por %p89, %p90
      %s93 = sadd.s32 %s92, 1
      %p96 = scmp.eq.s32.totalorder %s16, 1
      %p97 = scmp.ne.s32.totalorder %s92, %s94
      %p98 = scmp.eq.s32.totalorder %s16, 0
      %p99 = por %p97, %p98
      %p100 = scmp.ne.s32.totalorder %s92, %s94
      %p101 = scmp.eq.s32.totalorder %s21, 1
      %p102 = por %p100, %p101
      %p103 = scmp.ne.s32.totalorder %s94, %s95
      %p104 = scmp.eq.s32.totalorder %s21, 0
      %p105 = por %p103, %p104
      %p106 = scmp.ne.s32.totalorder %s94, %s95
      %p107 = scmp.eq.s32.totalorder %s22, 1
      %p108 = por %p106, %p107
      %p110 = scmp.ne.s32.totalorder %s95, %s109
      %p111 = scmp.eq.s32.totalorder %s22, 0
      %p112 = por %p110, %p111
      %s114 = sadd.s32 %s113, 1
      %p117 = scmp.eq.s32.totalorder %s16, 1
      %p118 = scmp.ne.s32.totalorder %s113, %s115
      %p119 = scmp.eq.s32.totalorder %s16, 0
      %p120 = por %p118, %p119
      %p121 = scmp.ne.s32.totalorder %s113, %s115
      %p122 = scmp.eq.s32.totalorder %s21, 1
      %p123 = por %p121, %p122
      %p124 = scmp.ne.s32.totalorder %s115, %s116
      %p125 = scmp.eq.s32.totalorder %s21, 0
      %p126 = por %p124, %p125
      %p127 = scmp.ne.s32.totalorder %s115, %s116
      %p128 = scmp.eq.s32.totalorder %s22, 1
      %p129 = por %p127, %p128
      %p131 = scmp.ne.s32.totalorder %s116, %s130
      %p132 = scmp.eq.s32.totalorder %s22, 0
      %p133 = por %p131, %p132
      %s135 = sadd.s32 %s134, 1
      %p138 = scmp.eq.s32.totalorder %s16, 1
      %p139 = scmp.ne.s32.totalorder %s134, %s136
      %p140 = scmp.eq.s32.totalorder %s16, 0
      %p141 = por %p139, %p140
      %p142 = scmp.ne.s32.totalorder %s134, %s136
      %p143 = scmp.eq.s32.totalorder %s21, 1
      %p144 = por %p142, %p143
      %p145 = scmp.ne.s32.totalorder %s136, %s137
      %p146 = scmp.eq.s32.totalorder %s21, 0
      %p147 = por %p145, %p146
      %p148 = scmp.ne.s32.totalorder %s136, %s137
      %p149 = scmp.eq.s32.totalorder %s22, 1
      %p150 = por %p148, %p149
      %p152 = scmp.ne.s32.totalorder %s137, %s151
      %p153 = scmp.eq.s32.totalorder %s22, 0
      %p154 = por %p152, %p153
      %s156 = sadd.s32 %s155, 1
      %p159 = scmp.eq.s32.totalorder %s16, 1
      %p160 = scmp.ne.s32.totalorder %s155, %s157
      %p161 = scmp.eq.s32.totalorder %s16, 0
      %p162 = por %p160, %p161
      %p163 = scmp.ne.s32.totalorder %s155, %s157
      %p164 = scmp.eq.s32.totalorder %s21, 1
      %p165 = por %p163, %p164
      %p166 = scmp.ne.s32.totalorder %s157, %s158
      %p167 = scmp.eq.s32.totalorder %s21, 0
      %p168 = por %p166, %p167
      %p169 = scmp.ne.s32.totalorder %s157, %s158
      %p170 = scmp.eq.s32.totalorder %s22, 1
      %p171 = por %p169, %p170
      %p173 = scmp.ne.s32.totalorder %s158, %s172
      %p174 = scmp.eq.s32.totalorder %s22, 0
      %p175 = por %p173, %p174
      %s176 = ssub.s32 %s16, %s23
      %p177 = scmp.eq.s32.totalorder %s176, 0
      %s179 = sadd.s32 %s178, 1
      %s180 = scalar_select %p177, %s178, %s179
      %p183 = pneg %p177
      %p184 = scmp.eq.s32.totalorder %s16, 1
      %p185 = por %p183, %p184
      %p186 = scmp.ne.s32.totalorder %s178, %s181
      %p187 = scmp.eq.s32.totalorder %s16, 0
      %p188 = por %p186, %p187
      %p189 = scmp.ne.s32.totalorder %s178, %s181
      %p190 = scmp.eq.s32.totalorder %s21, 1
      %p191 = por %p189, %p190
      %p192 = scmp.ne.s32.totalorder %s181, %s182
      %p193 = scmp.eq.s32.totalorder %s21, 0
      %p194 = por %p192, %p193
      %p195 = scmp.ne.s32.totalorder %s181, %s182
      %p196 = scmp.eq.s32.totalorder %s22, 1
      %p197 = por %p195, %p196
      %p199 = scmp.ne.s32.totalorder %s182, %s198
      %p200 = scmp.eq.s32.totalorder %s22, 0
      %p201 = por %p199, %p200
      %p202 = scmp.le.s32.totalorder 1, %s16
      %p203 = scmp.lt.s32.totalorder %s16, 3
      %p204 = pnand %p202, %p203
      %p205 = pneg %p204
      // Predicated region
      $region9: #{tpu_custom_call.1} parent=5 // pred_check
        _
      $region10: #{tpu_custom_call.1} parent=5 // pred_check_branch
        %207 = sbr.rel (%p204) target = $region12
      $region11: #{tpu_custom_call.1} parent=5 // pred_region
        %s208 = ssub.s32 %s16, 1
        // Predicated region
        $region13: #{tpu_custom_call.1} parent=11 // pred_check
          %p209 = pneg %p63
        $region14: #{tpu_custom_call.1} parent=11 // pred_check_branch
          %211 = sbr.rel (%p209) target = $region16
        $region15: #{tpu_custom_call.1} parent=11 // pred_region
          _
        $region16: #{tpu_custom_call.1} parent=11 // pred_fallthru
          _
        // Predicated region
        $region17: #{tpu_custom_call.1} parent=11 // pred_check
          %p212 = pneg %p84
        $region18: #{tpu_custom_call.1} parent=11 // pred_check_branch
          %214 = sbr.rel (%p212) target = $region20
        $region19: #{tpu_custom_call.1} parent=11 // pred_region
          _
        $region20: #{tpu_custom_call.1} parent=11 // pred_fallthru
          _
        // Predicated region
        $region21: #{tpu_custom_call.1} parent=11 // pred_check
          %p215 = pneg %p105
        $region22: #{tpu_custom_call.1} parent=11 // pred_check_branch
          %217 = sbr.rel (%p215) target = $region24
        $region23: #{tpu_custom_call.1} parent=11 // pred_region
          _
        $region24: #{tpu_custom_call.1} parent=11 // pred_fallthru
          _
        // Predicated region
        $region25: #{tpu_custom_call.1} parent=11 // pred_check
          %p218 = pneg %p126
        $region26: #{tpu_custom_call.1} parent=11 // pred_check_branch
          %220 = sbr.rel (%p218) target = $region28
        $region27: #{tpu_custom_call.1} parent=11 // pred_region
          _
        $region28: #{tpu_custom_call.1} parent=11 // pred_fallthru
          _
        // Predicated region
        $region29: #{tpu_custom_call.1} parent=11 // pred_check
          %p221 = pneg %p147
        $region30: #{tpu_custom_call.1} parent=11 // pred_check_branch
          %223 = sbr.rel (%p221) target = $region32
        $region31: #{tpu_custom_call.1} parent=11 // pred_region
          _
        $region32: #{tpu_custom_call.1} parent=11 // pred_fallthru
          _
        // Predicated region
        $region33: #{tpu_custom_call.1} parent=11 // pred_check
          %p224 = pneg %p168
        $region34: #{tpu_custom_call.1} parent=11 // pred_check_branch
          %226 = sbr.rel (%p224) target = $region36
        $region35: #{tpu_custom_call.1} parent=11 // pred_region
          _
        $region36: #{tpu_custom_call.1} parent=11 // pred_fallthru
          _
      $region12: #{tpu_custom_call.1} parent=5 // pred_fallthru
        _
      %p227 = scmp.lt.s32.totalorder %s16, 2
      // Predicated region
      $region37: #{tpu_custom_call.1} parent=5 // pred_check
        %p228 = pneg %p227
      $region38: #{tpu_custom_call.1} parent=5 // pred_check_branch
        %230 = sbr.rel (%p228) target = $region40
      $region39: #{tpu_custom_call.1} parent=5 // pred_region
        // Predicated region
        $region41: #{tpu_custom_call.1} parent=39 // pred_check
          %p231 = pneg %p36
        $region42: #{tpu_custom_call.1} parent=39 // pred_check_branch
          %233 = sbr.rel (%p231) target = $region44
        $region43: #{tpu_custom_call.1} parent=39 // pred_region
          %s234 = smul.u32 16, %s16
          %p235 = scmp.lt.s32.totalorder %s234, 31
          %s236 = scalar_select %p235, %s234, 31
          %s237 = smul.addr %s236, 8
          %s238 = scalar_lea.vmem %s0, %s237
          %s239 = smul.u32 16, %s16
        $region44: #{tpu_custom_call.1} parent=39 // pred_fallthru
          _
      $region40: #{tpu_custom_call.1} parent=5 // pred_fallthru
        _
      %p240 = scmp.le.s32.totalorder 1, %s16
      %p241 = scmp.lt.s32.totalorder %s16, 3
      %p242 = pnand %p240, %p241
      %p243 = pneg %p242
      // Predicated region
      $region45: #{tpu_custom_call.1} parent=5 // pred_check
        _
      $region46: #{tpu_custom_call.1} parent=5 // pred_check_branch
        %245 = sbr.rel (%p242) target = $region48
      $region47: #{tpu_custom_call.1} parent=5 // pred_region
        %s246 = ssub.s32 %s16, 1
        %s247 = smul.u32 16, %s21
        %p248 = scmp.lt.s32.totalorder %s247, 31
        %s249 = scalar_select %p248, %s247, 31
        %s250 = smul.addr %s249, 8
        %s251 = scalar_lea.vmem %s0, %s250
        %p252 = pneg %p42
        %p253 = pneg %p39
        %p254 = pneg %p63
        %p255 = pneg %p60
        %p256 = pneg %p84
        %p257 = pneg %p81
        %p258 = pneg %p105
        %p259 = pneg %p102
        %p260 = pneg %p126
        %p261 = pneg %p123
        %p262 = pneg %p147
        %p263 = pneg %p144
        %p264 = pneg %p168
        %p265 = pneg %p165
        %p266 = pneg %p194
        %p267 = pneg %p191
        %s268 = sand.u32 %s181, 1
        %s269 = scalar_lea.sflag [#allocation3], %s268
        %s270 = sand.u32 %s181, 1
        %s271 = smul.addr %s270, 8
        %s272 = scalar_lea.vmem [#allocation2], %s271
        %s273 = smul.u32 16, %s21
        %p274 = scmp.lt.s32.totalorder %s273, 31
        %s275 = scalar_select %p274, %s273, 31
        %s276 = smul.addr %s275, 8
        %s277 = scalar_lea.vmem %s0, %s276
        %s278 = smul.u32 16, %s21
        %v280 = vld [vmem:[%s277] sm:$0xff]
        %v281 = vld [vmem:[%s277 + $0x8] sm:$0xff]
        %v282 = vld [vmem:[%s277 + $0x10] sm:$0xff]
        %v283 = vld [vmem:[%s277 + $0x18] sm:$0xff]
        %v284 = vld [vmem:[%s277 + $0x20] sm:$0xff]
        %v285 = vld [vmem:[%s277 + $0x28] sm:$0xff]
        %v286 = vld [vmem:[%s277 + $0x30] sm:$0xff]
        %v287 = vld [vmem:[%s277 + $0x38] sm:$0xff]
        %v288 = vld [vmem:[%s277 + $0x40] sm:$0xff]
        %v289 = vld [vmem:[%s277 + $0x48] sm:$0xff]
        %v290 = vld [vmem:[%s277 + $0x50] sm:$0xff]
        %v291 = vld [vmem:[%s277 + $0x58] sm:$0xff]
        %v292 = vld [vmem:[%s277 + $0x60] sm:$0xff]
        %v293 = vld [vmem:[%s277 + $0x68] sm:$0xff]
        %v294 = vld [vmem:[%s277 + $0x70] sm:$0xff]
        %v295 = vld [vmem:[%s277 + $0x78] sm:$0xff]
        %v296 = vpack.c.bf16 %v281, %v280
        %v297 = vpack.c.bf16 %v283, %v282
        %v298 = vpack.c.bf16 %v285, %v284
        %v299 = vpack.c.bf16 %v287, %v286
        %v300 = vpack.c.bf16 %v289, %v288
        %v301 = vpack.c.bf16 %v291, %v290
        %v302 = vpack.c.bf16 %v293, %v292
        %v303 = vpack.c.bf16 %v295, %v294
        %v304 = vld [vmem:[%s1] sm:$0xf]
        %v305 = vld [vmem:[%s1 + $0x4] sm:$0xf]
        %v306 = vld [vmem:[%s1 + $0x8] sm:$0xf]
        %v307 = vld [vmem:[%s1 + $0xc] sm:$0xf]
        %v308 = vld [vmem:[%s1 + $0x10] sm:$0xf]
        %v309 = vld [vmem:[%s1 + $0x14] sm:$0xf]
        %v310 = vld [vmem:[%s1 + $0x18] sm:$0xf]
        %v311 = vld [vmem:[%s1 + $0x1c] sm:$0xf]
        %v312 = vld [vmem:[%s1 + $0x20] sm:$0xf]
        %v313 = vld [vmem:[%s1 + $0x24] sm:$0xf]
        %v314 = vld [vmem:[%s1 + $0x28] sm:$0xf]
        %v315 = vld [vmem:[%s1 + $0x2c] sm:$0xf]
        %v316 = vld [vmem:[%s1 + $0x30] sm:$0xf]
        %v317 = vld [vmem:[%s1 + $0x34] sm:$0xf]
        %v318 = vld [vmem:[%s1 + $0x38] sm:$0xf]
        %v319 = vld [vmem:[%s1 + $0x3c] sm:$0xf]
        %v320 = vld [vmem:[%s1 + $0x40] sm:$0xf]
        %v321 = vld [vmem:[%s1 + $0x44] sm:$0xf]
        %v322 = vld [vmem:[%s1 + $0x48] sm:$0xf]
        %v323 = vld [vmem:[%s1 + $0x4c] sm:$0xf]
        %v324 = vld [vmem:[%s1 + $0x50] sm:$0xf]
        %v325 = vld [vmem:[%s1 + $0x54] sm:$0xf]
        %v326 = vld [vmem:[%s1 + $0x58] sm:$0xf]
        %v327 = vld [vmem:[%s1 + $0x5c] sm:$0xf]
        %v328 = vld [vmem:[%s1 + $0x60] sm:$0xf]
        %v329 = vld [vmem:[%s1 + $0x64] sm:$0xf]
        %v330 = vld [vmem:[%s1 + $0x68] sm:$0xf]
        %v331 = vld [vmem:[%s1 + $0x6c] sm:$0xf]
        %v332 = vld [vmem:[%s1 + $0x70] sm:$0xf]
        %v333 = vld [vmem:[%s1 + $0x74] sm:$0xf]
        %v334 = vld [vmem:[%s1 + $0x78] sm:$0xf]
        %v335 = vld [vmem:[%s1 + $0x7c] sm:$0xf]
        %v336 = vld [vmem:[%s2] sm:$0xff]
        %v337 = vld [vmem:[%s2 + $0x8] sm:$0xff]
        %v338 = vld [vmem:[%s2 + $0x10] sm:$0xff]
        %v339 = vld [vmem:[%s2 + $0x18] sm:$0xff]
        %v340 = vld [vmem:[%s2 + $0x20] sm:$0xff]
        %v341 = vld [vmem:[%s2 + $0x28] sm:$0xff]
        %v342 = vld [vmem:[%s2 + $0x30] sm:$0xff]
        %v343 = vld [vmem:[%s2 + $0x38] sm:$0xff]
        %v344 = vld [vmem:[%s2 + $0x40] sm:$0xff]
        %v345 = vld [vmem:[%s2 + $0x48] sm:$0xff]
        %v346 = vld [vmem:[%s2 + $0x50] sm:$0xff]
        %v347 = vld [vmem:[%s2 + $0x58] sm:$0xff]
        %v348 = vld [vmem:[%s2 + $0x60] sm:$0xff]
        %v349 = vld [vmem:[%s2 + $0x68] sm:$0xff]
        %v350 = vld [vmem:[%s2 + $0x70] sm:$0xff]
        %v351 = vld [vmem:[%s2 + $0x78] sm:$0xff]
        %v352 = vld [vmem:[%s2 + $0x80] sm:$0xff]
        %v353 = vld [vmem:[%s2 + $0x88] sm:$0xff]
        %v354 = vld [vmem:[%s2 + $0x90] sm:$0xff]
        %v355 = vld [vmem:[%s2 + $0x98] sm:$0xff]
        %v356 = vld [vmem:[%s2 + $0xa0] sm:$0xff]
        %v357 = vld [vmem:[%s2 + $0xa8] sm:$0xff]
        %v358 = vld [vmem:[%s2 + $0xb0] sm:$0xff]
        %v359 = vld [vmem:[%s2 + $0xb8] sm:$0xff]
        %v360 = vld [vmem:[%s2 + $0xc0] sm:$0xff]
        %v361 = vld [vmem:[%s2 + $0xc8] sm:$0xff]
        %v362 = vld [vmem:[%s2 + $0xd0] sm:$0xff]
        %v363 = vld [vmem:[%s2 + $0xd8] sm:$0xff]
        %v364 = vld [vmem:[%s2 + $0xe0] sm:$0xff]
        %v365 = vld [vmem:[%s2 + $0xe8] sm:$0xff]
        %v366 = vld [vmem:[%s2 + $0xf0] sm:$0xff]
        %v367 = vld [vmem:[%s2 + $0xf8] sm:$0xff]
        %369 = vset.pattern.permute.xlu0 0
        %370 = vperm.xlu0 %369, %v336
        %v371 = vpop.permute.xlu0 %370
        %374 = vset.pattern.permute.xlu0 0
        %375 = vperm.xlu0 %374, %v337
        %v376 = vpop.permute.xlu0 %375
        %379 = vset.pattern.permute.xlu0 0
        %380 = vperm.xlu0 %379, %v338
        %v381 = vpop.permute.xlu0 %380
        %384 = vset.pattern.permute.xlu0 0
        %385 = vperm.xlu0 %384, %v339
        %v386 = vpop.permute.xlu0 %385
        %389 = vset.pattern.permute.xlu0 0
        %390 = vperm.xlu0 %389, %v340
        %v391 = vpop.permute.xlu0 %390
        %394 = vset.pattern.permute.xlu0 0
        %395 = vperm.xlu0 %394, %v341
        %v396 = vpop.permute.xlu0 %395
        %399 = vset.pattern.permute.xlu0 0
        %400 = vperm.xlu0 %399, %v342
        %v401 = vpop.permute.xlu0 %400
        %404 = vset.pattern.permute.xlu0 0
        %405 = vperm.xlu0 %404, %v343
        %v406 = vpop.permute.xlu0 %405
        %409 = vset.pattern.permute.xlu0 0
        %410 = vperm.xlu0 %409, %v344
        %v411 = vpop.permute.xlu0 %410
        %414 = vset.pattern.permute.xlu0 0
        %415 = vperm.xlu0 %414, %v345
        %v416 = vpop.permute.xlu0 %415
        %419 = vset.pattern.permute.xlu0 0
        %420 = vperm.xlu0 %419, %v346
        %v421 = vpop.permute.xlu0 %420
        %424 = vset.pattern.permute.xlu0 0
        %425 = vperm.xlu0 %424, %v347
        %v426 = vpop.permute.xlu0 %425
        %429 = vset.pattern.permute.xlu0 0
        %430 = vperm.xlu0 %429, %v348
        %v431 = vpop.permute.xlu0 %430
        %434 = vset.pattern.permute.xlu0 0
        %435 = vperm.xlu0 %434, %v349
        %v436 = vpop.permute.xlu0 %435
        %439 = vset.pattern.permute.xlu0 0
        %440 = vperm.xlu0 %439, %v350
        %v441 = vpop.permute.xlu0 %440
        %444 = vset.pattern.permute.xlu0 0
        %445 = vperm.xlu0 %444, %v351
        %v446 = vpop.permute.xlu0 %445
        %449 = vset.pattern.permute.xlu0 0
        %450 = vperm.xlu0 %449, %v352
        %v451 = vpop.permute.xlu0 %450
        %454 = vset.pattern.permute.xlu0 0
        %455 = vperm.xlu0 %454, %v353
        %v456 = vpop.permute.xlu0 %455
        %459 = vset.pattern.permute.xlu0 0
        %460 = vperm.xlu0 %459, %v354
        %v461 = vpop.permute.xlu0 %460
        %464 = vset.pattern.permute.xlu0 0
        %465 = vperm.xlu0 %464, %v355
        %v466 = vpop.permute.xlu0 %465
        %469 = vset.pattern.permute.xlu0 0
        %470 = vperm.xlu0 %469, %v356
        %v471 = vpop.permute.xlu0 %470
        %474 = vset.pattern.permute.xlu0 0
        %475 = vperm.xlu0 %474, %v357
        %v476 = vpop.permute.xlu0 %475
        %479 = vset.pattern.permute.xlu0 0
        %480 = vperm.xlu0 %479, %v358
        %v481 = vpop.permute.xlu0 %480
        %484 = vset.pattern.permute.xlu0 0
        %485 = vperm.xlu0 %484, %v359
        %v486 = vpop.permute.xlu0 %485
        %489 = vset.pattern.permute.xlu0 0
        %490 = vperm.xlu0 %489, %v360
        %v491 = vpop.permute.xlu0 %490
        %494 = vset.pattern.permute.xlu0 0
        %495 = vperm.xlu0 %494, %v361
        %v496 = vpop.permute.xlu0 %495
        %499 = vset.pattern.permute.xlu0 0
        %500 = vperm.xlu0 %499, %v362
        %v501 = vpop.permute.xlu0 %500
        %504 = vset.pattern.permute.xlu0 0
        %505 = vperm.xlu0 %504, %v363
        %v506 = vpop.permute.xlu0 %505
        %509 = vset.pattern.permute.xlu0 0
        %510 = vperm.xlu0 %509, %v364
        %v511 = vpop.permute.xlu0 %510
        %514 = vset.pattern.permute.xlu0 0
        %515 = vperm.xlu0 %514, %v365
        %v516 = vpop.permute.xlu0 %515
        %519 = vset.pattern.permute.xlu0 0
        %520 = vperm.xlu0 %519, %v366
        %v521 = vpop.permute.xlu0 %520
        %524 = vset.pattern.permute.xlu0 0
        %525 = vperm.xlu0 %524, %v367
        %v526 = vpop.permute.xlu0 %525
        %v560 = vunpack.c.l.b16 %v304
        %v561 = vunpack.c.l.b16 %v305
        %v562 = vunpack.c.l.b16 %v306
        %v563 = vunpack.c.l.b16 %v307
        %v564 = vunpack.c.l.b16 %v308
        %v565 = vunpack.c.l.b16 %v309
        %v566 = vunpack.c.l.b16 %v310
        %v567 = vunpack.c.l.b16 %v311
        %v568 = vunpack.c.l.b16 %v312
        %v569 = vunpack.c.l.b16 %v313
        %v570 = vunpack.c.l.b16 %v314
        %v571 = vunpack.c.l.b16 %v315
        %v572 = vunpack.c.l.b16 %v316
        %v573 = vunpack.c.l.b16 %v317
        %v574 = vunpack.c.l.b16 %v318
        %v575 = vunpack.c.l.b16 %v319
        %v576 = vunpack.c.l.b16 %v320
        %v577 = vunpack.c.l.b16 %v321
        %v578 = vunpack.c.l.b16 %v322
        %v579 = vunpack.c.l.b16 %v323
        %v580 = vunpack.c.l.b16 %v324
        %v581 = vunpack.c.l.b16 %v325
        %v582 = vunpack.c.l.b16 %v326
        %v583 = vunpack.c.l.b16 %v327
        %v584 = vunpack.c.l.b16 %v328
        %v585 = vunpack.c.l.b16 %v329
        %v586 = vunpack.c.l.b16 %v330
        %v587 = vunpack.c.l.b16 %v331
        %v588 = vunpack.c.l.b16 %v332
        %v589 = vunpack.c.l.b16 %v333
        %v590 = vunpack.c.l.b16 %v334
        %v591 = vunpack.c.l.b16 %v335
        %v592 = vpack.c.b16 %v561, %v560
        %v593 = vpack.c.b16 %v563, %v562
        %v594 = vpack.c.b16 %v565, %v564
        %v595 = vpack.c.b16 %v567, %v566
        %v596 = vpack.c.b16 %v569, %v568
        %v597 = vpack.c.b16 %v571, %v570
        %v598 = vpack.c.b16 %v573, %v572
        %v599 = vpack.c.b16 %v575, %v574
        %v600 = vpack.c.b16 %v577, %v576
        %v601 = vpack.c.b16 %v579, %v578
        %v602 = vpack.c.b16 %v581, %v580
        %v603 = vpack.c.b16 %v583, %v582
        %v604 = vpack.c.b16 %v585, %v584
        %v605 = vpack.c.b16 %v587, %v586
        %v606 = vpack.c.b16 %v589, %v588
        %v607 = vpack.c.b16 %v591, %v590
        %vm608 = vcmask 130048
        %v610 = vsel %vm608, %v592, 0
        %v613 = vsel %vm608, %v593, 0
        %v616 = vsel %vm608, %v594, 0
        %v619 = vsel %vm608, %v595, 0
        %v622 = vsel %vm608, %v596, 0
        %v625 = vsel %vm608, %v597, 0
        %v628 = vsel %vm608, %v598, 0
        %v631 = vsel %vm608, %v599, 0
        %v634 = vsel %vm608, %v600, 0
        %v637 = vsel %vm608, %v601, 0
        %v640 = vsel %vm608, %v602, 0
        %v643 = vsel %vm608, %v603, 0
        %v646 = vsel %vm608, %v604, 0
        %v649 = vsel %vm608, %v605, 0
        %v652 = vsel %vm608, %v606, 0
        %v655 = vsel %vm608, %v607, 0
        %v658 = vsel %vm608, %v296, 0
        %v661 = vsel %vm608, %v297, 0
        %v664 = vsel %vm608, %v298, 0
        %v667 = vsel %vm608, %v299, 0
        %v670 = vsel %vm608, %v300, 0
        %v673 = vsel %vm608, %v301, 0
        %v676 = vsel %vm608, %v302, 0
        %v679 = vsel %vm608, %v303, 0
        %681 = vmatprep.subr.bf16.mxu0 0
        %682 = vmatpush1.bf16.xpose.msra.mxu0 %v658
        %683 = vmatprep.subr.bf16.mxu0 0
        %684 = vmatpush1.bf16.xpose.msra.mxu0 %v661
        %685 = vmatprep.subr.bf16.mxu0 0
        %686 = vmatpush1.bf16.xpose.msra.mxu0 %v664
        %687 = vmatprep.subr.bf16.mxu0 0
        %688 = vmatpush1.bf16.xpose.msra.mxu0 %v667
        %689 = vmatprep.subr.bf16.mxu0 0
        %690 = vmatpush1.bf16.xpose.msra.mxu0 %v670
        %691 = vmatprep.subr.bf16.mxu0 0
        %692 = vmatpush1.bf16.xpose.msra.mxu0 %v673
        %693 = vmatprep.subr.bf16.mxu0 0
        %694 = vmatpush1.bf16.xpose.msra.mxu0 %v676
        %695 = vmatprep.subr.bf16.mxu0 0
        %696 = vmatpush1.bf16.xpose.msra.mxu0 %v679
        %697 = vmatprep.subr.bf16.mxu0 0
        %698 = vmatpush1.bf16.xpose.msra.mxu0 0
        %699 = vmatprep.subr.bf16.mxu0 0
        %700 = vmatpush1.bf16.xpose.msra.mxu0 0
        %701 = vmatprep.subr.bf16.mxu0 0
        %702 = vmatpush1.bf16.xpose.msra.mxu0 0
        %703 = vmatprep.subr.bf16.mxu0 0
        %704 = vmatpush1.bf16.xpose.msra.mxu0 0
        %705 = vmatprep.subr.bf16.mxu0 0
        %706 = vmatpush1.bf16.xpose.msra.mxu0 0
        %707 = vmatprep.subr.bf16.mxu0 0
        %708 = vmatpush1.bf16.xpose.msra.mxu0 0
        %709 = vmatprep.subr.bf16.mxu0 0
        %710 = vmatpush1.bf16.xpose.msra.mxu0 0
        %711 = vmatprep.subr.bf16.mxu0 0
        %712 = vmatpush1.bf16.xpose.msra.mxu0 0
        %713 = vmatprep.mubr.bf16.mxu0 0
        %714 = vmatmul.mubr.bf16.gmra.mrb[0].mxu0 %v610
        %v715 = vpop.f32.mrb[0].mxu0
        %v716 = vadd.f32 %v371, %v715
        %v717 = vpop.f32.mrb[0].mxu0
        %v718 = vpop.f32.mrb[0].mxu0
        %v719 = vadd.f32 %v376, %v718
        %v720 = vpop.f32.mrb[0].mxu0
        %721 = vmatprep.mubr.bf16.mxu0 0
        %722 = vmatmul.mubr.bf16.gmra.mrb[0].mxu0 %v613
        %v723 = vpop.f32.mrb[0].mxu0
        %v724 = vadd.f32 %v381, %v723
        %v725 = vpop.f32.mrb[0].mxu0
        %v726 = vpop.f32.mrb[0].mxu0
        %v727 = vadd.f32 %v386, %v726
        %v728 = vpop.f32.mrb[0].mxu0
        %729 = vmatprep.mubr.bf16.mxu0 0
        %730 = vmatmul.mubr.bf16.gmra.mrb[0].mxu0 %v616
        %v731 = vpop.f32.mrb[0].mxu0
        %v732 = vadd.f32 %v391, %v731
        %v733 = vpop.f32.mrb[0].mxu0
        %v734 = vpop.f32.mrb[0].mxu0
        %v735 = vadd.f32 %v396, %v734
        %v736 = vpop.f32.mrb[0].mxu0
        %737 = vmatprep.mubr.bf16.mxu0 0
        %738 = vmatmul.mubr.bf16.gmra.mrb[0].mxu0 %v619
        %v739 = vpop.f32.mrb[0].mxu0
        %v740 = vadd.f32 %v401, %v739
        %v741 = vpop.f32.mrb[0].mxu0
        %v742 = vpop.f32.mrb[0].mxu0
        %v743 = vadd.f32 %v406, %v742
        %v744 = vpop.f32.mrb[0].mxu0
        %745 = vmatprep.mubr.bf16.mxu0 0
        %746 = vmatmul.mubr.bf16.gmra.mrb[0].mxu0 %v622
        %v747 = vpop.f32.mrb[0].mxu0
        %v748 = vadd.f32 %v411, %v747
        %v749 = vpop.f32.mrb[0].mxu0
        %v750 = vpop.f32.mrb[0].mxu0
        %v751 = vadd.f32 %v416, %v750
        %v752 = vpop.f32.mrb[0].mxu0
        %753 = vmatprep.mubr.bf16.mxu0 0
        %754 = vmatmul.mubr.bf16.gmra.mrb[0].mxu0 %v625
        %v755 = vpop.f32.mrb[0].mxu0
        %v756 = vadd.f32 %v421, %v755
        %v757 = vpop.f32.mrb[0].mxu0
        %v758 = vpop.f32.mrb[0].mxu0
        %v759 = vadd.f32 %v426, %v758
        %v760 = vpop.f32.mrb[0].mxu0
        %761 = vmatprep.mubr.bf16.mxu0 0
        %762 = vmatmul.mubr.bf16.gmra.mrb[0].mxu0 %v628
        %v763 = vpop.f32.mrb[0].mxu0
        %v764 = vadd.f32 %v431, %v763
        %v765 = vpop.f32.mrb[0].mxu0
        %v766 = vpop.f32.mrb[0].mxu0
        %v767 = vadd.f32 %v436, %v766
        %v768 = vpop.f32.mrb[0].mxu0
        %769 = vmatprep.mubr.bf16.mxu0 0
        %770 = vmatmul.mubr.bf16.gmra.mrb[0].mxu0 %v631
        %v771 = vpop.f32.mrb[0].mxu0
        %v772 = vadd.f32 %v441, %v771
        %v773 = vpop.f32.mrb[0].mxu0
        %v774 = vpop.f32.mrb[0].mxu0
        %v775 = vadd.f32 %v446, %v774
        %v776 = vpop.f32.mrb[0].mxu0
        %777 = vmatprep.mubr.bf16.mxu0 0
        %778 = vmatmul.mubr.bf16.gmra.mrb[0].mxu0 %v634
        %v779 = vpop.f32.mrb[0].mxu0
        %v780 = vadd.f32 %v451, %v779
        %v781 = vpop.f32.mrb[0].mxu0
        %v782 = vpop.f32.mrb[0].mxu0
        %v783 = vadd.f32 %v456, %v782
        %v784 = vpop.f32.mrb[0].mxu0
        %785 = vmatprep.mubr.bf16.mxu0 0
        %786 = vmatmul.mubr.bf16.gmra.mrb[0].mxu0 %v637
        %v787 = vpop.f32.mrb[0].mxu0
        %v788 = vadd.f32 %v461, %v787
        %v789 = vpop.f32.mrb[0].mxu0
        %v790 = vpop.f32.mrb[0].mxu0
        %v791 = vadd.f32 %v466, %v790
        %v792 = vpop.f32.mrb[0].mxu0
        %793 = vmatprep.mubr.bf16.mxu0 0
        %794 = vmatmul.mubr.bf16.gmra.mrb[0].mxu0 %v640
        %v795 = vpop.f32.mrb[0].mxu0
        %v796 = vadd.f32 %v471, %v795
        %v797 = vpop.f32.mrb[0].mxu0
        %v798 = vpop.f32.mrb[0].mxu0
        %v799 = vadd.f32 %v476, %v798
        %v800 = vpop.f32.mrb[0].mxu0
        %801 = vmatprep.mubr.bf16.mxu0 0
        %802 = vmatmul.mubr.bf16.gmra.mrb[0].mxu0 %v643
        %v803 = vpop.f32.mrb[0].mxu0
        %v804 = vadd.f32 %v481, %v803
        %v805 = vpop.f32.mrb[0].mxu0
        %v806 = vpop.f32.mrb[0].mxu0
        %v807 = vadd.f32 %v486, %v806
        %v808 = vpop.f32.mrb[0].mxu0
        %809 = vmatprep.mubr.bf16.mxu0 0
        %810 = vmatmul.mubr.bf16.gmra.mrb[0].mxu0 %v646
        %v811 = vpop.f32.mrb[0].mxu0
        %v812 = vadd.f32 %v491, %v811
        %v813 = vpop.f32.mrb[0].mxu0
        %v814 = vpop.f32.mrb[0].mxu0
        %v815 = vadd.f32 %v496, %v814
        %v816 = vpop.f32.mrb[0].mxu0
        %817 = vmatprep.mubr.bf16.mxu0 0
        %818 = vmatmul.mubr.bf16.gmra.mrb[0].mxu0 %v649
        %v819 = vpop.f32.mrb[0].mxu0
        %v820 = vadd.f32 %v501, %v819
        %v821 = vpop.f32.mrb[0].mxu0
        %v822 = vpop.f32.mrb[0].mxu0
        %v823 = vadd.f32 %v506, %v822
        %v824 = vpop.f32.mrb[0].mxu0
        %825 = vmatprep.mubr.bf16.mxu0 0
        %826 = vmatmul.mubr.bf16.gmra.mrb[0].mxu0 %v652
        %v827 = vpop.f32.mrb[0].mxu0
        %v828 = vadd.f32 %v511, %v827
        %v829 = vpop.f32.mrb[0].mxu0
        %v830 = vpop.f32.mrb[0].mxu0
        %v831 = vadd.f32 %v516, %v830
        %v832 = vpop.f32.mrb[0].mxu0
        %833 = vmatprep.mubr.bf16.mxu0 0
        %834 = vmatmul.mubr.bf16.gmra.mrb[0].mxu0 %v655
        %v835 = vpop.f32.mrb[0].mxu0
        %v836 = vadd.f32 %v521, %v835
        %v837 = vpop.f32.mrb[0].mxu0
        %v838 = vpop.f32.mrb[0].mxu0
        %v839 = vadd.f32 %v526, %v838
        %v840 = vpop.f32.mrb[0].mxu0
        %841 = vdwg.mxu0
        %v842 = vmax.f32 %v716, 0.0
        %v843 = vmax.f32 %v719, 0.0
        %v844 = vmax.f32 %v724, 0.0
        %v845 = vmax.f32 %v727, 0.0
        %v846 = vmax.f32 %v732, 0.0
        %v847 = vmax.f32 %v735, 0.0
        %v848 = vmax.f32 %v740, 0.0
        %v849 = vmax.f32 %v743, 0.0
        %v850 = vmax.f32 %v748, 0.0
        %v851 = vmax.f32 %v751, 0.0
        %v852 = vmax.f32 %v756, 0.0
        %v853 = vmax.f32 %v759, 0.0
        %v854 = vmax.f32 %v764, 0.0
        %v855 = vmax.f32 %v767, 0.0
        %v856 = vmax.f32 %v772, 0.0
        %v857 = vmax.f32 %v775, 0.0
        %v858 = vmax.f32 %v780, 0.0
        %v859 = vmax.f32 %v783, 0.0
        %v860 = vmax.f32 %v788, 0.0
        %v861 = vmax.f32 %v791, 0.0
        %v862 = vmax.f32 %v796, 0.0
        %v863 = vmax.f32 %v799, 0.0
        %v864 = vmax.f32 %v804, 0.0
        %v865 = vmax.f32 %v807, 0.0
        %v866 = vmax.f32 %v812, 0.0
        %v867 = vmax.f32 %v815, 0.0
        %v868 = vmax.f32 %v820, 0.0
        %v869 = vmax.f32 %v823, 0.0
        %v870 = vmax.f32 %v828, 0.0
        %v871 = vmax.f32 %v831, 0.0
        %v872 = vmax.f32 %v836, 0.0
        %v873 = vmax.f32 %v839, 0.0
        %v874 = vld [vmem:[%s3] sm:$0xff]
        %v875 = vld [vmem:[%s3 + $0x8] sm:$0xff]
        %v876 = vld [vmem:[%s3 + $0x10] sm:$0xff]
        %v877 = vld [vmem:[%s3 + $0x18] sm:$0xff]
        %v878 = vld [vmem:[%s3 + $0x20] sm:$0xff]
        %v879 = vld [vmem:[%s3 + $0x28] sm:$0xff]
        %v880 = vld [vmem:[%s3 + $0x30] sm:$0xff]
        %v881 = vld [vmem:[%s3 + $0x38] sm:$0xff]
        %v882 = vld [vmem:[%s3 + $0x40] sm:$0xff]
        %v883 = vld [vmem:[%s3 + $0x48] sm:$0xff]
        %v884 = vld [vmem:[%s3 + $0x50] sm:$0xff]
        %v885 = vld [vmem:[%s3 + $0x58] sm:$0xff]
        %v886 = vld [vmem:[%s3 + $0x60] sm:$0xff]
        %v887 = vld [vmem:[%s3 + $0x68] sm:$0xff]
        %v888 = vld [vmem:[%s3 + $0x70] sm:$0xff]
        %v889 = vld [vmem:[%s3 + $0x78] sm:$0xff]
        %v890 = vld [vmem:[%s3 + $0x80] sm:$0xff]
        %v891 = vld [vmem:[%s3 + $0x88] sm:$0xff]
        %v892 = vld [vmem:[%s3 + $0x90] sm:$0xff]
        %v893 = vld [vmem:[%s3 + $0x98] sm:$0xff]
        %v894 = vld [vmem:[%s3 + $0xa0] sm:$0xff]
        %v895 = vld [vmem:[%s3 + $0xa8] sm:$0xff]
        %v896 = vld [vmem:[%s3 + $0xb0] sm:$0xff]
        %v897 = vld [vmem:[%s3 + $0xb8] sm:$0xff]
        %v898 = vld [vmem:[%s3 + $0xc0] sm:$0xff]
        %v899 = vld [vmem:[%s3 + $0xc8] sm:$0xff]
        %v900 = vld [vmem:[%s3 + $0xd0] sm:$0xff]
        %v901 = vld [vmem:[%s3 + $0xd8] sm:$0xff]
        %v902 = vld [vmem:[%s3 + $0xe0] sm:$0xff]
        %v903 = vld [vmem:[%s3 + $0xe8] sm:$0xff]
        %v904 = vld [vmem:[%s3 + $0xf0] sm:$0xff]
        %v905 = vld [vmem:[%s3 + $0xf8] sm:$0xff]
        %v906 = vpack.c.bf16 %v843, %v842
        %v907 = vpack.c.bf16 %v845, %v844
        %v908 = vpack.c.bf16 %v847, %v846
        %v909 = vpack.c.bf16 %v849, %v848
        %v910 = vpack.c.bf16 %v851, %v850
        %v911 = vpack.c.bf16 %v853, %v852
        %v912 = vpack.c.bf16 %v855, %v854
        %v913 = vpack.c.bf16 %v857, %v856
        %v914 = vpack.c.bf16 %v859, %v858
        %v915 = vpack.c.bf16 %v861, %v860
        %v916 = vpack.c.bf16 %v863, %v862
        %v917 = vpack.c.bf16 %v865, %v864
        %v918 = vpack.c.bf16 %v867, %v866
        %v919 = vpack.c.bf16 %v869, %v868
        %v920 = vpack.c.bf16 %v871, %v870
        %v921 = vpack.c.bf16 %v873, %v872
        %v922 = vld [vmem:[%s4] sm:$0xff]
        %v923 = vld [vmem:[%s4 + $0x8] sm:$0xff]
        %v924 = vld [vmem:[%s4 + $0x10] sm:$0xff]
        %v925 = vld [vmem:[%s4 + $0x18] sm:$0xff]
        %v926 = vld [vmem:[%s4 + $0x20] sm:$0xff]
        %v927 = vld [vmem:[%s4 + $0x28] sm:$0xff]
        %v928 = vld [vmem:[%s4 + $0x30] sm:$0xff]
        %v929 = vld [vmem:[%s4 + $0x38] sm:$0xff]
        %v930 = vld [vmem:[%s4 + $0x40] sm:$0xff]
        %v931 = vld [vmem:[%s4 + $0x48] sm:$0xff]
        %v932 = vld [vmem:[%s4 + $0x50] sm:$0xff]
        %v933 = vld [vmem:[%s4 + $0x58] sm:$0xff]
        %v934 = vld [vmem:[%s4 + $0x60] sm:$0xff]
        %v935 = vld [vmem:[%s4 + $0x68] sm:$0xff]
        %v936 = vld [vmem:[%s4 + $0x70] sm:$0xff]
        %v937 = vld [vmem:[%s4 + $0x78] sm:$0xff]
        %v938 = vld [vmem:[%s4 + $0x80] sm:$0xff]
        %v939 = vld [vmem:[%s4 + $0x88] sm:$0xff]
        %v940 = vld [vmem:[%s4 + $0x90] sm:$0xff]
        %v941 = vld [vmem:[%s4 + $0x98] sm:$0xff]
        %v942 = vld [vmem:[%s4 + $0xa0] sm:$0xff]
        %v943 = vld [vmem:[%s4 + $0xa8] sm:$0xff]
        %v944 = vld [vmem:[%s4 + $0xb0] sm:$0xff]
        %v945 = vld [vmem:[%s4 + $0xb8] sm:$0xff]
        %v946 = vld [vmem:[%s4 + $0xc0] sm:$0xff]
        %v947 = vld [vmem:[%s4 + $0xc8] sm:$0xff]
        %v948 = vld [vmem:[%s4 + $0xd0] sm:$0xff]
        %v949 = vld [vmem:[%s4 + $0xd8] sm:$0xff]
        %v950 = vld [vmem:[%s4 + $0xe0] sm:$0xff]
        %v951 = vld [vmem:[%s4 + $0xe8] sm:$0xff]
        %v952 = vld [vmem:[%s4 + $0xf0] sm:$0xff]
        %v953 = vld [vmem:[%s4 + $0xf8] sm:$0xff]
        %955 = vset.pattern.permute.xlu0 0
        %956 = vperm.xlu0 %955, %v922
        %v957 = vpop.permute.xlu0 %956
        %960 = vset.pattern.permute.xlu0 0
        %961 = vperm.xlu0 %960, %v923
        %v962 = vpop.permute.xlu0 %961
        %965 = vset.pattern.permute.xlu0 0
        %966 = vperm.xlu0 %965, %v924
        %v967 = vpop.permute.xlu0 %966
        %970 = vset.pattern.permute.xlu0 0
        %971 = vperm.xlu0 %970, %v925
        %v972 = vpop.permute.xlu0 %971
        %975 = vset.pattern.permute.xlu0 0
        %976 = vperm.xlu0 %975, %v926
        %v977 = vpop.permute.xlu0 %976
        %980 = vset.pattern.permute.xlu0 0
        %981 = vperm.xlu0 %980, %v927
        %v982 = vpop.permute.xlu0 %981
        %985 = vset.pattern.permute.xlu0 0
        %986 = vperm.xlu0 %985, %v928
        %v987 = vpop.permute.xlu0 %986
        %990 = vset.pattern.permute.xlu0 0
        %991 = vperm.xlu0 %990, %v929
        %v992 = vpop.permute.xlu0 %991
        %995 = vset.pattern.permute.xlu0 0
        %996 = vperm.xlu0 %995, %v930
        %v997 = vpop.permute.xlu0 %996
        %1000 = vset.pattern.permute.xlu0 0
        %1001 = vperm.xlu0 %1000, %v931
        %v1002 = vpop.permute.xlu0 %1001
        %1005 = vset.pattern.permute.xlu0 0
        %1006 = vperm.xlu0 %1005, %v932
        %v1007 = vpop.permute.xlu0 %1006
        %1010 = vset.pattern.permute.xlu0 0
        %1011 = vperm.xlu0 %1010, %v933
        %v1012 = vpop.permute.xlu0 %1011
        %1015 = vset.pattern.permute.xlu0 0
        %1016 = vperm.xlu0 %1015, %v934
        %v1017 = vpop.permute.xlu0 %1016
        %1020 = vset.pattern.permute.xlu0 0
        %1021 = vperm.xlu0 %1020, %v935
        %v1022 = vpop.permute.xlu0 %1021
        %1025 = vset.pattern.permute.xlu0 0
        %1026 = vperm.xlu0 %1025, %v936
        %v1027 = vpop.permute.xlu0 %1026
        %1030 = vset.pattern.permute.xlu0 0
        %1031 = vperm.xlu0 %1030, %v937
        %v1032 = vpop.permute.xlu0 %1031
        %1035 = vset.pattern.permute.xlu0 0
        %1036 = vperm.xlu0 %1035, %v938
        %v1037 = vpop.permute.xlu0 %1036
        %1040 = vset.pattern.permute.xlu0 0
        %1041 = vperm.xlu0 %1040, %v939
        %v1042 = vpop.permute.xlu0 %1041
        %1045 = vset.pattern.permute.xlu0 0
        %1046 = vperm.xlu0 %1045, %v940
        %v1047 = vpop.permute.xlu0 %1046
        %1050 = vset.pattern.permute.xlu0 0
        %1051 = vperm.xlu0 %1050, %v941
        %v1052 = vpop.permute.xlu0 %1051
        %1055 = vset.pattern.permute.xlu0 0
        %1056 = vperm.xlu0 %1055, %v942
        %v1057 = vpop.permute.xlu0 %1056
        %1060 = vset.pattern.permute.xlu0 0
        %1061 = vperm.xlu0 %1060, %v943
        %v1062 = vpop.permute.xlu0 %1061
        %1065 = vset.pattern.permute.xlu0 0
        %1066 = vperm.xlu0 %1065, %v944
        %v1067 = vpop.permute.xlu0 %1066
        %1070 = vset.pattern.permute.xlu0 0
        %1071 = vperm.xlu0 %1070, %v945
        %v1072 = vpop.permute.xlu0 %1071
        %1075 = vset.pattern.permute.xlu0 0
        %1076 = vperm.xlu0 %1075, %v946
        %v1077 = vpop.permute.xlu0 %1076
        %1080 = vset.pattern.permute.xlu0 0
        %1081 = vperm.xlu0 %1080, %v947
        %v1082 = vpop.permute.xlu0 %1081
        %1085 = vset.pattern.permute.xlu0 0
        %1086 = vperm.xlu0 %1085, %v948
        %v1087 = vpop.permute.xlu0 %1086
        %1090 = vset.pattern.permute.xlu0 0
        %1091 = vperm.xlu0 %1090, %v949
        %v1092 = vpop.permute.xlu0 %1091
        %1095 = vset.pattern.permute.xlu0 0
        %1096 = vperm.xlu0 %1095, %v950
        %v1097 = vpop.permute.xlu0 %1096
        %1100 = vset.pattern.permute.xlu0 0
        %1101 = vperm.xlu0 %1100, %v951
        %v1102 = vpop.permute.xlu0 %1101
        %1105 = vset.pattern.permute.xlu0 0
        %1106 = vperm.xlu0 %1105, %v952
        %v1107 = vpop.permute.xlu0 %1106
        %1110 = vset.pattern.permute.xlu0 0
        %1111 = vperm.xlu0 %1110, %v953
        %v1112 = vpop.permute.xlu0 %1111
        %v1146 = vunpack.c.l.b16 %v874
        %v1147 = vunpack.c.h.b16 %v874
        %v1148 = vunpack.c.l.b16 %v875
        %v1149 = vunpack.c.h.b16 %v875
        %v1150 = vunpack.c.l.b16 %v876
        %v1151 = vunpack.c.h.b16 %v876
        %v1152 = vunpack.c.l.b16 %v877
        %v1153 = vunpack.c.h.b16 %v877
        %v1154 = vunpack.c.l.b16 %v878
        %v1155 = vunpack.c.h.b16 %v878
        %v1156 = vunpack.c.l.b16 %v879
        %v1157 = vunpack.c.h.b16 %v879
        %v1158 = vunpack.c.l.b16 %v880
        %v1159 = vunpack.c.h.b16 %v880
        %v1160 = vunpack.c.l.b16 %v881
        %v1161 = vunpack.c.h.b16 %v881
        %v1162 = vunpack.c.l.b16 %v882
        %v1163 = vunpack.c.h.b16 %v882
        %v1164 = vunpack.c.l.b16 %v883
        %v1165 = vunpack.c.h.b16 %v883
        %v1166 = vunpack.c.l.b16 %v884
        %v1167 = vunpack.c.h.b16 %v884
        %v1168 = vunpack.c.l.b16 %v885
        %v1169 = vunpack.c.h.b16 %v885
        %v1170 = vunpack.c.l.b16 %v886
        %v1171 = vunpack.c.h.b16 %v886
        %v1172 = vunpack.c.l.b16 %v887
        %v1173 = vunpack.c.h.b16 %v887
        %v1174 = vunpack.c.l.b16 %v888
        %v1175 = vunpack.c.h.b16 %v888
        %v1176 = vunpack.c.l.b16 %v889
        %v1177 = vunpack.c.h.b16 %v889
        %v1178 = vunpack.c.l.b16 %v890
        %v1179 = vunpack.c.h.b16 %v890
        %v1180 = vunpack.c.l.b16 %v891
        %v1181 = vunpack.c.h.b16 %v891
        %v1182 = vunpack.c.l.b16 %v892
        %v1183 = vunpack.c.h.b16 %v892
        %v1184 = vunpack.c.l.b16 %v893
        %v1185 = vunpack.c.h.b16 %v893
        %v1186 = vunpack.c.l.b16 %v894
        %v1187 = vunpack.c.h.b16 %v894
        %v1188 = vunpack.c.l.b16 %v895
        %v1189 = vunpack.c.h.b16 %v895
        %v1190 = vunpack.c.l.b16 %v896
        %v1191 = vunpack.c.h.b16 %v896
        %v1192 = vunpack.c.l.b16 %v897
        %v1193 = vunpack.c.h.b16 %v897
        %v1194 = vunpack.c.l.b16 %v898
        %v1195 = vunpack.c.h.b16 %v898
        %v1196 = vunpack.c.l.b16 %v899
        %v1197 = vunpack.c.h.b16 %v899
        %v1198 = vunpack.c.l.b16 %v900
        %v1199 = vunpack.c.h.b16 %v900
        %v1200 = vunpack.c.l.b16 %v901
        %v1201 = vunpack.c.h.b16 %v901
        %v1202 = vunpack.c.l.b16 %v902
        %v1203 = vunpack.c.h.b16 %v902
        %v1204 = vunpack.c.l.b16 %v903
        %v1205 = vunpack.c.h.b16 %v903
        %v1206 = vunpack.c.l.b16 %v904
        %v1207 = vunpack.c.h.b16 %v904
        %v1208 = vunpack.c.l.b16 %v905
        %v1209 = vunpack.c.h.b16 %v905
        %v1210 = vpack.c.b16 %v1148, %v1146
        %v1211 = vpack.c.b16 %v1149, %v1147
        %v1212 = vpack.c.b16 %v1152, %v1150
        %v1213 = vpack.c.b16 %v1153, %v1151
        %v1214 = vpack.c.b16 %v1156, %v1154
        %v1215 = vpack.c.b16 %v1157, %v1155
        %v1216 = vpack.c.b16 %v1160, %v1158
        %v1217 = vpack.c.b16 %v1161, %v1159
        %v1218 = vpack.c.b16 %v1164, %v1162
        %v1219 = vpack.c.b16 %v1165, %v1163
        %v1220 = vpack.c.b16 %v1168, %v1166
        %v1221 = vpack.c.b16 %v1169, %v1167
        %v1222 = vpack.c.b16 %v1172, %v1170
        %v1223 = vpack.c.b16 %v1173, %v1171
        %v1224 = vpack.c.b16 %v1176, %v1174
        %v1225 = vpack.c.b16 %v1177, %v1175
        %v1226 = vpack.c.b16 %v1180, %v1178
        %v1227 = vpack.c.b16 %v1181, %v1179
        %v1228 = vpack.c.b16 %v1184, %v1182
        %v1229 = vpack.c.b16 %v1185, %v1183
        %v1230 = vpack.c.b16 %v1188, %v1186
        %v1231 = vpack.c.b16 %v1189, %v1187
        %v1232 = vpack.c.b16 %v1192, %v1190
        %v1233 = vpack.c.b16 %v1193, %v1191
        %v1234 = vpack.c.b16 %v1196, %v1194
        %v1235 = vpack.c.b16 %v1197, %v1195
        %v1236 = vpack.c.b16 %v1200, %v1198
        %v1237 = vpack.c.b16 %v1201, %v1199
        %v1238 = vpack.c.b16 %v1204, %v1202
        %v1239 = vpack.c.b16 %v1205, %v1203
        %v1240 = vpack.c.b16 %v1208, %v1206
        %v1241 = vpack.c.b16 %v1209, %v1207
        %1274 = vmatprep.subr.bf16.mxu0 0
        %1275 = vmatpush1.bf16.msra.mxu0 %v906
        %1276 = vmatprep.subr.bf16.mxu0 0
        %1277 = vmatpush1.bf16.msra.mxu0 %v907
        %1278 = vmatprep.subr.bf16.mxu0 0
        %1279 = vmatpush1.bf16.msra.mxu0 %v908
        %1280 = vmatprep.subr.bf16.mxu0 0
        %1281 = vmatpush1.bf16.msra.mxu0 %v909
        %1282 = vmatprep.subr.bf16.mxu0 0
        %1283 = vmatpush1.bf16.msra.mxu0 %v910
        %1284 = vmatprep.subr.bf16.mxu0 0
        %1285 = vmatpush1.bf16.msra.mxu0 %v911
        %1286 = vmatprep.subr.bf16.mxu0 0
        %1287 = vmatpush1.bf16.msra.mxu0 %v912
        %1288 = vmatprep.subr.bf16.mxu0 0
        %1289 = vmatpush1.bf16.msra.mxu0 %v913
        %1290 = vmatprep.subr.bf16.mxu0 0
        %1291 = vmatpush1.bf16.msra.mxu0 %v914
        %1292 = vmatprep.subr.bf16.mxu0 0
        %1293 = vmatpush1.bf16.msra.mxu0 %v915
        %1294 = vmatprep.subr.bf16.mxu0 0
        %1295 = vmatpush1.bf16.msra.mxu0 %v916
        %1296 = vmatprep.subr.bf16.mxu0 0
        %1297 = vmatpush1.bf16.msra.mxu0 %v917
        %1298 = vmatprep.subr.bf16.mxu0 0
        %1299 = vmatpush1.bf16.msra.mxu0 %v918
        %1300 = vmatprep.subr.bf16.mxu0 0
        %1301 = vmatpush1.bf16.msra.mxu0 %v919
        %1302 = vmatprep.subr.bf16.mxu0 0
        %1303 = vmatpush1.bf16.msra.mxu0 %v920
        %1304 = vmatprep.subr.bf16.mxu0 0
        %1305 = vmatpush1.bf16.msra.mxu0 %v921
        %1306 = vmatprep.mubr.bf16.mxu0 %v1211
        %1307 = vmatmul.mubr.bf16.gmra.mrb[0].mxu0 %v1210
        %v1308 = vpop.f32.mrb[0].mxu0
        %v1309 = vadd.f32 %v957, %v1308
        %v1310 = vpop.f32.mrb[0].mxu0
        %v1311 = vpop.f32.mrb[0].mxu0
        %v1312 = vadd.f32 %v962, %v1311
        %v1313 = vpop.f32.mrb[0].mxu0
        %1314 = vmatprep.mubr.bf16.mxu0 %v1213
        %1315 = vmatmul.mubr.bf16.gmra.mrb[0].mxu0 %v1212
        %v1316 = vpop.f32.mrb[0].mxu0
        %v1317 = vadd.f32 %v967, %v1316
        %v1318 = vpop.f32.mrb[0].mxu0
        %v1319 = vpop.f32.mrb[0].mxu0
        %v1320 = vadd.f32 %v972, %v1319
        %v1321 = vpop.f32.mrb[0].mxu0
        %1322 = vmatprep.mubr.bf16.mxu0 %v1215
        %1323 = vmatmul.mubr.bf16.gmra.mrb[0].mxu0 %v1214
        %v1324 = vpop.f32.mrb[0].mxu0
        %v1325 = vadd.f32 %v977, %v1324
        %v1326 = vpop.f32.mrb[0].mxu0
        %v1327 = vpop.f32.mrb[0].mxu0
        %v1328 = vadd.f32 %v982, %v1327
        %v1329 = vpop.f32.mrb[0].mxu0
        %1330 = vmatprep.mubr.bf16.mxu0 %v1217
        %1331 = vmatmul.mubr.bf16.gmra.mrb[0].mxu0 %v1216
        %v1332 = vpop.f32.mrb[0].mxu0
        %v1333 = vadd.f32 %v987, %v1332
        %v1334 = vpop.f32.mrb[0].mxu0
        %v1335 = vpop.f32.mrb[0].mxu0
        %v1336 = vadd.f32 %v992, %v1335
        %v1337 = vpop.f32.mrb[0].mxu0
        %1338 = vmatprep.mubr.bf16.mxu0 %v1219
        %1339 = vmatmul.mubr.bf16.gmra.mrb[0].mxu0 %v1218
        %v1340 = vpop.f32.mrb[0].mxu0
        %v1341 = vadd.f32 %v997, %v1340
        %v1342 = vpop.f32.mrb[0].mxu0
        %v1343 = vpop.f32.mrb[0].mxu0
        %v1344 = vadd.f32 %v1002, %v1343
        %v1345 = vpop.f32.mrb[0].mxu0
        %1346 = vmatprep.mubr.bf16.mxu0 %v1221
        %1347 = vmatmul.mubr.bf16.gmra.mrb[0].mxu0 %v1220
        %v1348 = vpop.f32.mrb[0].mxu0
        %v1349 = vadd.f32 %v1007, %v1348
        %v1350 = vpop.f32.mrb[0].mxu0
        %v1351 = vpop.f32.mrb[0].mxu0
        %v1352 = vadd.f32 %v1012, %v1351
        %v1353 = vpop.f32.mrb[0].mxu0
        %1354 = vmatprep.mubr.bf16.mxu0 %v1223
        %1355 = vmatmul.mubr.bf16.gmra.mrb[0].mxu0 %v1222
        %v1356 = vpop.f32.mrb[0].mxu0
        %v1357 = vadd.f32 %v1017, %v1356
        %v1358 = vpop.f32.mrb[0].mxu0
        %v1359 = vpop.f32.mrb[0].mxu0
        %v1360 = vadd.f32 %v1022, %v1359
        %v1361 = vpop.f32.mrb[0].mxu0
        %1362 = vmatprep.mubr.bf16.mxu0 %v1225
        %1363 = vmatmul.mubr.bf16.gmra.mrb[0].mxu0 %v1224
        %v1364 = vpop.f32.mrb[0].mxu0
        %v1365 = vadd.f32 %v1027, %v1364
        %v1366 = vpop.f32.mrb[0].mxu0
        %v1367 = vpop.f32.mrb[0].mxu0
        %v1368 = vadd.f32 %v1032, %v1367
        %v1369 = vpop.f32.mrb[0].mxu0
        %1370 = vmatprep.mubr.bf16.mxu0 %v1227
        %1371 = vmatmul.mubr.bf16.gmra.mrb[0].mxu0 %v1226
        %v1372 = vpop.f32.mrb[0].mxu0
        %v1373 = vadd.f32 %v1037, %v1372
        %v1374 = vpop.f32.mrb[0].mxu0
        %v1375 = vpop.f32.mrb[0].mxu0
        %v1376 = vadd.f32 %v1042, %v1375
        %v1377 = vpop.f32.mrb[0].mxu0
        %1378 = vmatprep.mubr.bf16.mxu0 %v1229
        %1379 = vmatmul.mubr.bf16.gmra.mrb[0].mxu0 %v1228
        %v1380 = vpop.f32.mrb[0].mxu0
        %v1381 = vadd.f32 %v1047, %v1380
        %v1382 = vpop.f32.mrb[0].mxu0
        %v1383 = vpop.f32.mrb[0].mxu0
        %v1384 = vadd.f32 %v1052, %v1383
        %v1385 = vpop.f32.mrb[0].mxu0
        %1386 = vmatprep.mubr.bf16.mxu0 %v1231
        %1387 = vmatmul.mubr.bf16.gmra.mrb[0].mxu0 %v1230
        %v1388 = vpop.f32.mrb[0].mxu0
        %v1389 = vadd.f32 %v1057, %v1388
        %v1390 = vpop.f32.mrb[0].mxu0
        %v1391 = vpop.f32.mrb[0].mxu0
        %v1392 = vadd.f32 %v1062, %v1391
        %v1393 = vpop.f32.mrb[0].mxu0
        %1394 = vmatprep.mubr.bf16.mxu0 %v1233
        %1395 = vmatmul.mubr.bf16.gmra.mrb[0].mxu0 %v1232
        %v1396 = vpop.f32.mrb[0].mxu0
        %v1397 = vadd.f32 %v1067, %v1396
        %v1398 = vpop.f32.mrb[0].mxu0
        %v1399 = vpop.f32.mrb[0].mxu0
        %v1400 = vadd.f32 %v1072, %v1399
        %v1401 = vpop.f32.mrb[0].mxu0
        %1402 = vmatprep.mubr.bf16.mxu0 %v1235
        %1403 = vmatmul.mubr.bf16.gmra.mrb[0].mxu0 %v1234
        %v1404 = vpop.f32.mrb[0].mxu0
        %v1405 = vadd.f32 %v1077, %v1404
        %v1406 = vpop.f32.mrb[0].mxu0
        %v1407 = vpop.f32.mrb[0].mxu0
        %v1408 = vadd.f32 %v1082, %v1407
        %v1409 = vpop.f32.mrb[0].mxu0
        %1410 = vmatprep.mubr.bf16.mxu0 %v1237
        %1411 = vmatmul.mubr.bf16.gmra.mrb[0].mxu0 %v1236
        %v1412 = vpop.f32.mrb[0].mxu0
        %v1413 = vadd.f32 %v1087, %v1412
        %v1414 = vpop.f32.mrb[0].mxu0
        %v1415 = vpop.f32.mrb[0].mxu0
        %v1416 = vadd.f32 %v1092, %v1415
        %v1417 = vpop.f32.mrb[0].mxu0
        %1418 = vmatprep.mubr.bf16.mxu0 %v1239
        %1419 = vmatmul.mubr.bf16.gmra.mrb[0].mxu0 %v1238
        %v1420 = vpop.f32.mrb[0].mxu0
        %v1421 = vadd.f32 %v1097, %v1420
        %v1422 = vpop.f32.mrb[0].mxu0
        %v1423 = vpop.f32.mrb[0].mxu0
        %v1424 = vadd.f32 %v1102, %v1423
        %v1425 = vpop.f32.mrb[0].mxu0
        %1426 = vmatprep.mubr.bf16.mxu0 %v1241
        %1427 = vmatmul.mubr.bf16.gmra.mrb[0].mxu0 %v1240
        %v1428 = vpop.f32.mrb[0].mxu0
        %v1429 = vadd.f32 %v1107, %v1428
        %v1430 = vpop.f32.mrb[0].mxu0
        %v1431 = vpop.f32.mrb[0].mxu0
        %v1432 = vadd.f32 %v1112, %v1431
        %v1433 = vpop.f32.mrb[0].mxu0
        %1434 = vdwg.mxu0
        %v1435 = vmax.f32 %v1309, 0.0
        %v1436 = vmax.f32 %v1312, 0.0
        %v1437 = vmax.f32 %v1317, 0.0
        %v1438 = vmax.f32 %v1320, 0.0
        %v1439 = vmax.f32 %v1325, 0.0
        %v1440 = vmax.f32 %v1328, 0.0
        %v1441 = vmax.f32 %v1333, 0.0
        %v1442 = vmax.f32 %v1336, 0.0
        %v1443 = vmax.f32 %v1341, 0.0
        %v1444 = vmax.f32 %v1344, 0.0
        %v1445 = vmax.f32 %v1349, 0.0
        %v1446 = vmax.f32 %v1352, 0.0
        %v1447 = vmax.f32 %v1357, 0.0
        %v1448 = vmax.f32 %v1360, 0.0
        %v1449 = vmax.f32 %v1365, 0.0
        %v1450 = vmax.f32 %v1368, 0.0
        %v1451 = vmax.f32 %v1373, 0.0
        %v1452 = vmax.f32 %v1376, 0.0
        %v1453 = vmax.f32 %v1381, 0.0
        %v1454 = vmax.f32 %v1384, 0.0
        %v1455 = vmax.f32 %v1389, 0.0
        %v1456 = vmax.f32 %v1392, 0.0
        %v1457 = vmax.f32 %v1397, 0.0
        %v1458 = vmax.f32 %v1400, 0.0
        %v1459 = vmax.f32 %v1405, 0.0
        %v1460 = vmax.f32 %v1408, 0.0
        %v1461 = vmax.f32 %v1413, 0.0
        %v1462 = vmax.f32 %v1416, 0.0
        %v1463 = vmax.f32 %v1421, 0.0
        %v1464 = vmax.f32 %v1424, 0.0
        %v1465 = vmax.f32 %v1429, 0.0
        %v1466 = vmax.f32 %v1432, 0.0
        %v1467 = vld [vmem:[%s5] sm:$0xff]
        %v1468 = vpack.c.bf16 %v1436, %v1435
        %v1469 = vpack.c.bf16 %v1438, %v1437
        %v1470 = vpack.c.bf16 %v1440, %v1439
        %v1471 = vpack.c.bf16 %v1442, %v1441
        %v1472 = vpack.c.bf16 %v1444, %v1443
        %v1473 = vpack.c.bf16 %v1446, %v1445
        %v1474 = vpack.c.bf16 %v1448, %v1447
        %v1475 = vpack.c.bf16 %v1450, %v1449
        %v1476 = vpack.c.bf16 %v1452, %v1451
        %v1477 = vpack.c.bf16 %v1454, %v1453
        %v1478 = vpack.c.bf16 %v1456, %v1455
        %v1479 = vpack.c.bf16 %v1458, %v1457
        %v1480 = vpack.c.bf16 %v1460, %v1459
        %v1481 = vpack.c.bf16 %v1462, %v1461
        %v1482 = vpack.c.bf16 %v1464, %v1463
        %v1483 = vpack.c.bf16 %v1466, %v1465
        %v1484 = vld [vmem:[%s6] sm:$0xff]
        %1486 = vset.pattern.permute.xlu0 0
        %1487 = vperm.xlu0 %1486, %v1484
        %v1488 = vpop.permute.xlu0 %1487
        %v1491 = vunpack.c.l.b16 %v1467
        %v1492 = vunpack.c.h.b16 %v1467
        %v1493 = vpack.c.b16 %v1491, %v1491
        %v1494 = vpack.c.b16 %v1492, %v1492
        %1497 = vmatprep.subr.bf16.mxu0 0
        %1498 = vmatpush1.bf16.msra.mxu0 %v1468
        %1499 = vmatprep.subr.bf16.mxu0 0
        %1500 = vmatpush1.bf16.msra.mxu0 %v1469
        %1501 = vmatprep.subr.bf16.mxu0 0
        %1502 = vmatpush1.bf16.msra.mxu0 %v1470
        %1503 = vmatprep.subr.bf16.mxu0 0
        %1504 = vmatpush1.bf16.msra.mxu0 %v1471
        %1505 = vmatprep.subr.bf16.mxu0 0
        %1506 = vmatpush1.bf16.msra.mxu0 %v1472
        %1507 = vmatprep.subr.bf16.mxu0 0
        %1508 = vmatpush1.bf16.msra.mxu0 %v1473
        %1509 = vmatprep.subr.bf16.mxu0 0
        %1510 = vmatpush1.bf16.msra.mxu0 %v1474
        %1511 = vmatprep.subr.bf16.mxu0 0
        %1512 = vmatpush1.bf16.msra.mxu0 %v1475
        %1513 = vmatprep.subr.bf16.mxu0 0
        %1514 = vmatpush1.bf16.msra.mxu0 %v1476
        %1515 = vmatprep.subr.bf16.mxu0 0
        %1516 = vmatpush1.bf16.msra.mxu0 %v1477
        %1517 = vmatprep.subr.bf16.mxu0 0
        %1518 = vmatpush1.bf16.msra.mxu0 %v1478
        %1519 = vmatprep.subr.bf16.mxu0 0
        %1520 = vmatpush1.bf16.msra.mxu0 %v1479
        %1521 = vmatprep.subr.bf16.mxu0 0
        %1522 = vmatpush1.bf16.msra.mxu0 %v1480
        %1523 = vmatprep.subr.bf16.mxu0 0
        %1524 = vmatpush1.bf16.msra.mxu0 %v1481
        %1525 = vmatprep.subr.bf16.mxu0 0
        %1526 = vmatpush1.bf16.msra.mxu0 %v1482
        %1527 = vmatprep.subr.bf16.mxu0 0
        %1528 = vmatpush1.bf16.msra.mxu0 %v1483
        %1529 = vmatprep.mubr.bf16.mxu0 %v1494
        %1530 = vmatmul.mubr.bf16.gmra.mrb[0].mxu0 %v1493
        %v1531 = vpop.f32.mrb[0].mxu0
        %v1532 = vadd.f32 %v1488, %v1531
        %v1533 = vpop.f32.mrb[0].mxu0
        %v1534 = vpop.f32.mrb[0].mxu0
        %v1535 = vpop.f32.mrb[0].mxu0
        %1536 = vdwg.mxu0
        %v1537 = vtanh.pop %v1532
        %1538 = vst [vmem:[%s272] sm:$0xff] %v1537
        %s1539 = sand.u32 %s181, 1
        %s1540 = scalar_lea.sflag [#allocation3], %s1539
        %s1541 = sand.u32 %s181, 1
        %s1542 = smul.addr %s1541, 8
        %s1543 = scalar_lea.vmem [#allocation2], %s1542
        // Predicated region
        $region49: #{tpu_custom_call.1} parent=47 // pred_check
          %p1544 = pneg %p191
        $region50: #{tpu_custom_call.1} parent=47 // pred_check_branch
          %1546 = sbr.rel (%p1544) target = $region52
        $region51: #{tpu_custom_call.1} parent=47 // pred_region
          %s1548 = ssub.s32 128, 128
          %1549 = vsyncadd %s1540, %s1548
          %s1550 = smul.addr %s21, 128
          %s1551 = scalar_lea.hbm %s7, %s1550
          %s1553 = sshll.u32 %s1543, 4
          %s1554 = int_to_ptr.vmem [resolvable:$true] %s1553
          %1556 = dma.vmem_to_hbm [thread:$0]  %s1554, 128, %s1551, %s1540
        $region52: #{tpu_custom_call.1} parent=47 // pred_fallthru
          _
      $region48: #{tpu_custom_call.1} parent=5 // pred_fallthru
        _
      %p1557 = scmp.le.s32.totalorder 2, %s16
      // Predicated region
      $region53: #{tpu_custom_call.1} parent=5 // pred_check
        %p1558 = pneg %p1557
      $region54: #{tpu_custom_call.1} parent=5 // pred_check_branch
        %1560 = sbr.rel (%p1558) target = $region56
      $region55: #{tpu_custom_call.1} parent=5 // pred_region
        %s1561 = ssub.s32 %s16, 2
        // Predicated region
        $region57: #{tpu_custom_call.1} parent=55 // pred_check
          %p1562 = pneg %p197
        $region58: #{tpu_custom_call.1} parent=55 // pred_check_branch
          %1564 = sbr.rel (%p1562) target = $region60
        $region59: #{tpu_custom_call.1} parent=55 // pred_region
          %s1565 = sand.u32 %s182, 1
          %s1566 = scalar_lea.sflag [#allocation3], %s1565
          %s1567 = sand.u32 %s182, 1
          %s1568 = smul.addr %s1567, 8
          %s1569 = scalar_lea.vmem [#allocation2], %s1568
          %1570 = dma.done %s1566, 128
        $region60: #{tpu_custom_call.1} parent=55 // pred_fallthru
          _
      $region56: #{tpu_custom_call.1} parent=5 // pred_fallthru
        _
    $region6: #{tpu_custom_call.1} parent=1 // loop_footer
      %s20 = sadd.s32 1, %s16
    $region7: #{tpu_custom_call.1} parent=1 // loop_footer_branch
      %15 = sbr.rel target = $region3
    $region8: #{tpu_custom_call.1} parent=1 // loop_exit
      _
    %1571 = vsyncpa [#allocation3], 1
    %s1572 = scalar_lea.sflag [#allocation3], 1
    %1573 = vsyncpa %s1572, 1

</llo_original>
